<compile_context>
chip_gen: v7x
topology: tpu7x:2x2x1
jax: 0.10.0
libtpu: 0.0.40
codegen_flags: <defaults>
</compile_context>

<pallas_src>
import jax
import jax.numpy as jnp
from jax.experimental import pallas as pl
from jax.experimental.pallas import tpu as pltpu

_LANE_WIDTH = 1024                     # 8 sublanes * 128 lanes
_TARGET_BLOCK_BYTES = 2 * 1024 * 1024  # ~2 MiB per block buffer (safe on v5e/v6e/v7x)
_SINGLE_BLOCK_BYTES = 512 * 1024       # below this, one block is fine (no pipelining win)


def _hswish_kernel(x_ref, o_ref):
    # Python float literals lower as immediates (no captured constants).
    x = x_ref[...].astype(jnp.float32)
    y = x * jnp.clip(x + 3.0, 0.0, 6.0) * (1.0 / 6.0)
    o_ref[...] = y.astype(o_ref.dtype)


def hard_swish(x, *, target_block_bytes=_TARGET_BLOCK_BYTES, width=_LANE_WIDTH):
    """Element-wise hard-swish via a single lane-dense Pallas call."""
    assert jnp.issubdtype(x.dtype, jnp.floating), (
        "hard_swish expects a floating-point input dtype")

    orig_shape = x.shape
    total = x.size
    itemsize = jnp.dtype(x.dtype).itemsize
    sublane = max(8, 32 // itemsize)      # sublane tile: 8 f32, 16 bf16, 32 int8/fp8

    # --- Lay the data out as a lane-dense (rows, width) slab. ---------------
    if total % width == 0:
        # Free, metadata-only reshape: no extra HBM pass.
        rows = total // width
        x2 = x.reshape(rows, width)
        padded = False
    else:
        # Ragged total: pad only the tail (< width elements). hswish(0) == 0,
        # so zero padding is semantically safe.
        # TODO(synk): handle the <width tail with a tiny separate op to avoid
        # the extra HBM pass from pad + un-pad slice on ragged sizes.
        rows = pl.cdiv(total, width)
        flat = jnp.pad(x.reshape(-1), (0, rows * width - total))
        x2 = flat.reshape(rows, width)
        padded = True

    slab_bytes = rows * width * itemsize

    # --- Pick the row-block size (bytes-targeted, pipelined). ---------------
    if slab_bytes <= _SINGLE_BLOCK_BYTES:
        # Tiny slab: one block; block shape == full array, so the (8,128)
        # divisibility rule is waived and there is no padding requirement.
        grid = (1,)
        bm = rows
    else:
        # Cap by target bytes (floor to sublane tile) and by "at least ~4 grid
        # steps" (ceil to sublane tile) so reads/writes overlap and a dual-TC
        # chip can shard the row axis.
        bm_cap_bytes = max(sublane,
                           (target_block_bytes // (width * itemsize))
                           // sublane * sublane)
        bm_cap_steps = pl.cdiv(pl.cdiv(rows, 4), sublane) * sublane
        bm = max(sublane, min(bm_cap_bytes, bm_cap_steps))
        grid = (pl.cdiv(rows, bm),)       # ragged last block is masked by Pallas

    out = pl.pallas_call(
        _hswish_kernel,
        grid=grid,
        in_specs=[pl.BlockSpec((bm, width), lambda i: (i, 0))],
        out_specs=pl.BlockSpec((bm, width), lambda i: (i, 0)),
        out_shape=jax.ShapeDtypeStruct((rows, width), x.dtype),
        compiler_params=pltpu.CompilerParams(
            dimension_semantics=("parallel",),  # lets v7x shard rows over 2 TCs
        ),
    )(x2)

    if padded:
        return out.reshape(-1)[:total].reshape(orig_shape)
    return out.reshape(orig_shape)


def _hard_swish_reference(x):
    xf = x.astype(jnp.float32)
    return (xf * jnp.clip(xf + 3.0, 0.0, 6.0) / 6.0).astype(x.dtype)


if __name__ == "__main__":
    key = jax.random.PRNGKey(0)

    # Shape implied by the module's elementwise forward: small NCHW activation.
    x = jax.random.normal(key, (2, 4, 16, 16), jnp.float32) * 4.0  # spans clip range
    y = jax.block_until_ready(hard_swish(x))
    assert y.shape == x.shape, (y.shape, x.shape)
    assert bool(jnp.all(jnp.isfinite(y)))
    y_ref = _hard_swish_reference(x)
    assert bool(jnp.allclose(y, y_ref, atol=1e-6, rtol=1e-6)), "mismatch vs reference"

    # Ragged total (not a multiple of 1024) exercises the pad/un-pad path.
    key2 = jax.random.PRNGKey(0)
    x2 = jax.random.normal(key2, (2, 3, 7, 11), jnp.float32) * 4.0
    y2 = jax.block_until_ready(hard_swish(x2))
    assert y2.shape == x2.shape
    assert bool(jnp.allclose(y2, _hard_swish_reference(x2), atol=1e-6, rtol=1e-6)), \
        "ragged-path mismatch vs reference"

    print("KERNEL_OK")
</pallas_src>

<mosaic_0001>
module attributes {stable_mosaic.version = 11 : i64} {
  func.func @_hswish_kernel(%arg0: i32, %arg1: memref<2x1024xf32, #tpu.memory_space<vmem>>, %arg2: memref<2x1024xf32, #tpu.memory_space<vmem>>) attributes {dimension_semantics = [#tpu.dimension_semantics<parallel>], iteration_bounds = array<i64: 1>, scalar_prefetch = 0 : i64, scratch_operands = 0 : i64, tpu.core_type = #tpu.core_type<tc>, window_params = [{transform_indices = @transform_0, window_bounds = array<i64: 2, 1024>}, {transform_indices = @transform_1, window_bounds = array<i64: 2, 1024>}]} {
    %c0 = arith.constant 0 : index
    %c0_0 = arith.constant 0 : index
    %0 = vector.load %arg1[%c0, %c0_0] : memref<2x1024xf32, #tpu.memory_space<vmem>>, vector<2x1024xf32>
    %cst = arith.constant 3.000000e+00 : f32
    %1 = vector.broadcast %cst : f32 to vector<2x1024xf32>
    %2 = arith.addf %0, %1 : vector<2x1024xf32>
    %cst_1 = arith.constant 0.000000e+00 : f32
    %cst_2 = arith.constant 6.000000e+00 : f32
    %3 = vector.broadcast %cst_1 : f32 to vector<2x1024xf32>
    %4 = arith.maximumf %3, %2 : vector<2x1024xf32>
    %5 = vector.broadcast %cst_2 : f32 to vector<2x1024xf32>
    %6 = arith.minimumf %5, %4 : vector<2x1024xf32>
    %7 = arith.mulf %0, %6 : vector<2x1024xf32>
    %cst_3 = arith.constant 0.166666672 : f32
    %8 = vector.broadcast %cst_3 : f32 to vector<2x1024xf32>
    %9 = arith.mulf %7, %8 : vector<2x1024xf32>
    %c0_4 = arith.constant 0 : index
    %c0_5 = arith.constant 0 : index
    %10 = vector.load %arg2[%c0_4, %c0_5] : memref<2x1024xf32, #tpu.memory_space<vmem>>, vector<2x1024xf32>
    tpu.vector_store %arg2[%c0_4, %c0_5], %9 {strides = array<i32>} : memref<2x1024xf32, #tpu.memory_space<vmem>>, vector<2x1024xf32>,
    return
  }
  func.func @transform_0(%arg0: i32) -> (i32, i32) {
    %c0_i32 = arith.constant 0 : i32
    %c0_i32_0 = arith.constant 0 : i32
    return %arg0, %c0_i32 : i32, i32
  }
  func.func @transform_1(%arg0: i32) -> (i32, i32) {
    %c0_i32 = arith.constant 0 : i32
    %c0_i32_0 = arith.constant 0 : i32
    return %arg0, %c0_i32 : i32, i32
  }
}

</mosaic_0001>

<llo_original>
// kernel: tpu_custom_call.1
$region0: #{tpu_custom_call.1}
  #allocation0 [shape = 'u32[]', space=smem, size = 0x4, offset = 0x4, fixed_abs, tag = 'smem constant byte address 0x4 - core index']
  #allocation1 [shape = 'u32[144,128]{1,0:T(1,128)}', space=vmem, size = 0x12000, scoped, tag = 'internal scratch']
  %s0 = inlined_call_operand.hbm [shape: f32[2,1024], index: 0, kind: input, shape index: {}]
  %s1 = inlined_call_operand.hbm [shape: f32[2,1024], index: 1, kind: output, shape index: {}]
  %s2 = sld [smem:[#allocation0]]
  $region18: #{tpu_custom_call.1} parent=0
    _
  %s4 = ssub.s32 1, %s2
  %s5 = scalar_select 0, %s4, %s2
  $region1: #{tpu_custom_call.1} parent=0
    #allocation2 [shape = 'u8[8192]{0}', space=vmem, size = 0x2000, scoped, tag = 'input window, operand 0, single buffered']
    #allocation3 [shape = 's32[1]{0}', space=sflag, size = 0x4, scoped, tag = 'scoped memory for tpu_custom_call.1']
    #allocation4 [shape = 's32[1]{0}', space=sflag, size = 0x4, scoped, tag = 'scoped memory for tpu_custom_call.1']
    #allocation5 [shape = 'u8[8192]{0}', space=vmem, size = 0x2000, scoped, tag = 'output window, operand 0, single buffered']
    %6 = vsyncpa [#allocation3], 0
    %7 = vsyncpa [#allocation4], 0
    // Predicated region
    $region2: #{tpu_custom_call.1} parent=1 // pred_check
      _
    $region3: #{tpu_custom_call.1} parent=1 // pred_check_branch
      %9 = sbr.rel (0) target = $region5
    $region4: #{tpu_custom_call.1} parent=1 // pred_region
      %s11 = ssub.s32 256, 256
      %12 = vsyncadd [#allocation3], %s11
      %s14 = sshll.u32 [#allocation2], 4
      %s15 = int_to_ptr.vmem [resolvable:$true] %s14
      %17 = dma.hbm_to_vmem [thread:$0]  %s0, 256, %s15, [#allocation3]
    $region5: #{tpu_custom_call.1} parent=1 // pred_fallthru
      _
    // Predicated region
    $region6: #{tpu_custom_call.1} parent=1 // pred_check
      _
    $region7: #{tpu_custom_call.1} parent=1 // pred_check_branch
      %19 = sbr.rel (0) target = $region9
    $region8: #{tpu_custom_call.1} parent=1 // pred_region
      %20 = dma.done [#allocation3], 256
    $region9: #{tpu_custom_call.1} parent=1 // pred_fallthru
      _
    %v21 = vld [vmem:[#allocation2] sm:$0xff]
    %v22 = vld [vmem:[#allocation2 + $0x8] sm:$0xff]
    %v23 = vadd.f32 %v21, 3.0
    %v24 = vadd.f32 %v22, 3.0
    %v25 = vmax.f32 %v23, 0.0
    %v26 = vmax.f32 %v24, 0.0
    %v27 = vmin.f32 %v25, 6.0
    %v28 = vmin.f32 %v26, 6.0
    %v29 = vmul.f32 %v21, %v27
    %v30 = vmul.f32 %v22, %v28
    %v31 = vmul.f32 %v29, 0.16666667
    %v32 = vmul.f32 %v30, 0.16666667
    %33 = vst [vmem:[#allocation5] sm:$0xff] %v31
    %34 = vst [vmem:[#allocation5 + $0x8] sm:$0xff] %v32
    // Predicated region
    $region10: #{tpu_custom_call.1} parent=1 // pred_check
      _
    $region11: #{tpu_custom_call.1} parent=1 // pred_check_branch
      %36 = sbr.rel (0) target = $region13
    $region12: #{tpu_custom_call.1} parent=1 // pred_region
      %s38 = ssub.s32 256, 256
      %39 = vsyncadd [#allocation4], %s38
      %s41 = sshll.u32 [#allocation5], 4
      %s42 = int_to_ptr.vmem [resolvable:$true] %s41
      %44 = dma.vmem_to_hbm [thread:$0]  %s42, 256, %s1, [#allocation4]
    $region13: #{tpu_custom_call.1} parent=1 // pred_fallthru
      _
    // Predicated region
    $region14: #{tpu_custom_call.1} parent=1 // pred_check
      _
    $region15: #{tpu_custom_call.1} parent=1 // pred_check_branch
      %46 = sbr.rel (0) target = $region17
    $region16: #{tpu_custom_call.1} parent=1 // pred_region
      %47 = dma.done [#allocation4], 256
    $region17: #{tpu_custom_call.1} parent=1 // pred_fallthru
      _
    %48 = vsyncpa [#allocation3], 1
    %49 = vsyncpa [#allocation4], 1

</llo_original>
